<compile_context>
chip_gen: v5e
topology: v5e:2x2
jax: 0.10.0
libtpu: 0.0.40
codegen_flags: <defaults>
</compile_context>

<pallas_src>
import numpy as np
import jax
import jax.numpy as jnp
from jax import lax
from jax.experimental import pallas as pl
from jax.experimental.pallas import tpu as pltpu

EPS = 1e-12


# ----------------------------------------------------------------------------
# Geometry precompute (mirror of tt_2sensors.__build / TravelTimeOperator._build)
# __init__-time glue, kept in numpy on host.
# ----------------------------------------------------------------------------
def _tt_2sensors_build(sensors, img_size):
    sensors = np.asarray(sensors, dtype=np.float32)
    x1, y1 = sensors[0]
    x2, y2 = sensors[1]
    slope = (y2 - y1) / (x2 - x1)
    ppw = np.float32(1.0 / img_size)
    n_pts_x = int(abs(x2 - x1) / ppw)       # truncation, like .type(torch.int)
    n_pts_y = int(abs(y2 - y1) / ppw)
    intersect_vert = None
    intersect_horz = None
    if n_pts_x > 0:
        xs = x1 + np.arange(1, n_pts_x + 1, dtype=np.float32) * ppw * np.sign(x2 - x1)
        ys = y2 - slope * (x2 - xs)
        intersect_vert = np.stack((xs, ys), axis=-1)
    if n_pts_y > 0:
        ys = y1 + np.arange(1, n_pts_y + 1, dtype=np.float32) * ppw * np.sign(y2 - y1)
        xs = x2 - (y2 - ys) / slope
        intersect_horz = np.stack((xs, ys), axis=-1)
    all_pts = sensors.copy()
    if intersect_horz is not None:
        all_pts = np.concatenate((sensors, intersect_horz), axis=0)
    if intersect_vert is not None:
        all_pts = np.concatenate((all_pts, intersect_vert), axis=0)
    order = np.argsort(all_pts[:, 0], kind="stable")   # argsort(..., dim=0)[:, 0]
    all_pts = all_pts[order]
    midpoints = (all_pts[:-1] + all_pts[1:]) / 2.0
    lengths = np.linalg.norm(all_pts[:-1] - all_pts[1:], axis=-1)
    midpoints = np.clip((midpoints + 1.0) / 2.0, 0.0, 1.0 - EPS)
    pixel_idx = np.floor(midpoints / ppw).astype(np.int64)
    return lengths.astype(np.float32), pixel_idx


def build_traveltime(sensors, img_size):
    """Mirror of TravelTimeOperator._build."""
    sensors = np.asarray(sensors, dtype=np.float32)
    N = len(sensors)
    lengths, idx, nelems = [], [], []
    for i in range(N - 1):
        for j in range(i + 1, N):
            sense2 = np.stack((sensors[i], sensors[j]), axis=0)
            l, pix = _tt_2sensors_build(sense2, img_size)
            lengths.append(l)
            idx.append(pix)
            nelems.append(len(l))
    return np.concatenate(lengths), np.concatenate(idx, axis=0), nelems


def _round_up(x, m):
    return ((x + m - 1) // m) * m


def build_dense_operator_T(lengths, idx, nelems, img_size, P_pad, R_pad):
    """Fold gather + per-ray segmented sum into a dense, pre-transposed,
    pre-padded operator A^T of shape [P_pad, R_pad] (pixels x rays)."""
    A_T = np.zeros((P_pad, R_pad), dtype=np.float32)
    start = 0
    for r, n in enumerate(nelems):
        flat = idx[start:start + n, 0] * img_size + idx[start:start + n, 1]
        np.add.at(A_T[:, r], flat, lengths[start:start + n])
        start += n
    return A_T


# ----------------------------------------------------------------------------
# Pallas kernel: y = x @ A^T on the MXU.
#   grid = (ray_tiles ["parallel"], pixel_tiles ["arbitrary" reduction, last])
#   o_ref is the accumulator (output block index constant across the k axis).
# ----------------------------------------------------------------------------
def _tt_kernel(x_ref, at_ref, o_ref):
    @pl.when(pl.program_id(1) == 0)
    def _init():
        o_ref[...] = jnp.zeros_like(o_ref)

    # (8, TK) @ (TK, RN) -> (8, RN), lane-dense accumulate directly in o_ref.
    o_ref[...] += jnp.dot(
        x_ref[...], at_ref[...],
        preferred_element_type=jnp.float32,
        precision=lax.Precision.HIGHEST)


def traveltime_forward(A_T_pad, img, n_rays, *, TK, RN):
    """Forward pass of TravelTimeOperator: returns y_measured of shape (n_rays,)."""
    P_pad, R_pad = A_T_pad.shape
    assert P_pad % TK == 0 and R_pad % RN == 0

    # x as an (8, P_pad) slab: row 0 = flattened image, rows 1..7 zero.
    # This keeps the MXU M-dim sublane-aligned; extra rows cost nothing vs A.
    P = img.size
    x = img.reshape(1, -1).astype(jnp.float32)
    x = jnp.pad(x, ((0, 7), (0, P_pad - P)))

    # VMEM budget: double-buffered inputs + output block, with headroom.
    vmem_bytes = 2 * (8 * TK + TK * RN) * 4 + 2 * (8 * RN) * 4
    vmem_limit = int(min(max(4 * vmem_bytes, 8 << 20), 64 << 20))

    y = pl.pallas_call(
        _tt_kernel,
        out_shape=jax.ShapeDtypeStruct((8, R_pad), jnp.float32),
        grid_spec=pltpu.PrefetchScalarGridSpec(
            num_scalar_prefetch=0,
            grid=(R_pad // RN, P_pad // TK),
            in_specs=[
                pl.BlockSpec((8, TK), lambda j, k: (0, k)),     # x tile
                pl.BlockSpec((TK, RN), lambda j, k: (k, j)),    # A^T tile
            ],
            out_specs=pl.BlockSpec((8, RN), lambda j, k: (0, j)),
        ),
        compiler_params=pltpu.CompilerParams(
            dimension_semantics=("parallel", "arbitrary"),
            vmem_limit_bytes=vmem_limit),
    )(x, A_T_pad)
    return y[0, :n_rays]


# ----------------------------------------------------------------------------
# Main
# ----------------------------------------------------------------------------
if __name__ == "__main__":
    img_size = 16
    # Deterministic sensor locations in [-1, 1]^2 (4 sensors -> 6 ray pairs).
    sensors = np.array(
        [[-0.80, -0.50],
         [ 0.60,  0.70],
         [-0.30,  0.90],
         [ 0.75, -0.65]], dtype=np.float32)

    lengths, idx, nelems = build_traveltime(sensors, img_size)
    n_rays = len(nelems)

    # Tile sizes: pixel tile up to 512 (HBM-roofline sweet spot), ray tile up
    # to 512 lanes; both clamp to the (padded) problem size so the tiny test
    # case collapses to a single grid invocation.
    P = img_size * img_size
    TK = min(512, _round_up(P, 128))
    P_pad = _round_up(P, TK)
    RN = min(512, _round_up(max(n_rays, 1), 128))
    R_pad = _round_up(n_rays, RN)

    A_T = build_dense_operator_T(lengths, idx, nelems, img_size, P_pad, R_pad)

    # Deterministic example input image.
    key = jax.random.PRNGKey(0)
    img = jax.random.uniform(key, (img_size, img_size), dtype=jnp.float32)

    y = traveltime_forward(jnp.asarray(A_T), img, n_rays, TK=TK, RN=RN)
    y = jax.block_until_ready(y)

    # Reference (pure numpy, mirroring the PyTorch forward exactly).
    img_np = np.asarray(img)
    pix = img_np[idx[:, 0], idx[:, 1]] * lengths
    splits = np.split(pix, np.cumsum(nelems)[:-1])
    ref = np.array([c.sum() for c in splits], dtype=np.float32)

    assert np.allclose(np.asarray(y), ref, rtol=1e-4, atol=1e-5), (np.asarray(y), ref)
    print("KERNEL_OK")
</pallas_src>

<mosaic_0001>
module attributes {stable_mosaic.version = 11 : i64} {
  func.func @_tt_kernel(%arg0: i32, %arg1: i32, %arg2: memref<8x256xf32, #tpu.memory_space<vmem>>, %arg3: memref<256x128xf32, #tpu.memory_space<vmem>>, %arg4: memref<8x128xf32, #tpu.memory_space<vmem>>) attributes {dimension_semantics = [#tpu.dimension_semantics<parallel>, #tpu.dimension_semantics<arbitrary>], iteration_bounds = array<i64: 1, 1>, scalar_prefetch = 0 : i64, scratch_operands = 0 : i64, tpu.core_type = #tpu.core_type<tc>, window_params = [{transform_indices = @transform_0, window_bounds = array<i64: 8, 256>}, {transform_indices = @transform_1, window_bounds = array<i64: 256, 128>}, {transform_indices = @transform_2, window_bounds = array<i64: 8, 128>}]} {
    %c0_i32 = arith.constant 0 : i32
    %0 = arith.cmpi eq, %arg1, %c0_i32 : i32
    %1 = arith.extui %0 : i1 to i32
    %c0_i32_0 = arith.constant 0 : i32
    %2 = arith.cmpi ne, %1, %c0_i32_0 : i32
    scf.if %2 {
      %cst_8 = arith.constant 0.000000e+00 : f32
      %9 = vector.broadcast %cst_8 : f32 to vector<8x128xf32>
      %c0_9 = arith.constant 0 : index
      %c0_10 = arith.constant 0 : index
      %10 = vector.load %arg4[%c0_9, %c0_10] : memref<8x128xf32, #tpu.memory_space<vmem>>, vector<8x128xf32>
      tpu.vector_store %arg4[%c0_9, %c0_10], %9 {strides = array<i32>} : memref<8x128xf32, #tpu.memory_space<vmem>>, vector<8x128xf32>,
    } else {
    }
    %c0 = arith.constant 0 : index
    %c0_1 = arith.constant 0 : index
    %3 = vector.load %arg4[%c0, %c0_1] : memref<8x128xf32, #tpu.memory_space<vmem>>, vector<8x128xf32>
    %c0_2 = arith.constant 0 : index
    %c0_3 = arith.constant 0 : index
    %4 = vector.load %arg2[%c0_2, %c0_3] : memref<8x256xf32, #tpu.memory_space<vmem>>, vector<8x256xf32>
    %c0_4 = arith.constant 0 : index
    %c0_5 = arith.constant 0 : index
    %5 = vector.load %arg3[%c0_4, %c0_5] : memref<256x128xf32, #tpu.memory_space<vmem>>, vector<256x128xf32>
    %cst = arith.constant dense<0.000000e+00> : vector<8x128xf32>
    %6 = tpu.matmul %4, %5, %cst {dimension_numbers = #tpu.dot_dimension_numbers<[1], [0], [0], [1], [0, 0, 1, 1], [], []>, precision = #tpu.contract_precision<fp32>} : vector<8x256xf32>, vector<256x128xf32>, vector<8x128xf32> -> vector<8x128xf32>
    %7 = arith.addf %3, %6 : vector<8x128xf32>
    %c0_6 = arith.constant 0 : index
    %c0_7 = arith.constant 0 : index
    %8 = vector.load %arg4[%c0_6, %c0_7] : memref<8x128xf32, #tpu.memory_space<vmem>>, vector<8x128xf32>
    tpu.vector_store %arg4[%c0_6, %c0_7], %7 {strides = array<i32>} : memref<8x128xf32, #tpu.memory_space<vmem>>, vector<8x128xf32>,
    return
  }
  func.func @transform_0(%arg0: i32, %arg1: i32) -> (i32, i32) {
    %c0_i32 = arith.constant 0 : i32
    %c0_i32_0 = arith.constant 0 : i32
    return %c0_i32, %arg1 : i32, i32
  }
  func.func @transform_1(%arg0: i32, %arg1: i32) -> (i32, i32) {
    %c0_i32 = arith.constant 0 : i32
    return %arg1, %arg0 : i32, i32
  }
  func.func @transform_2(%arg0: i32, %arg1: i32) -> (i32, i32) {
    %c0_i32 = arith.constant 0 : i32
    %c0_i32_0 = arith.constant 0 : i32
    return %c0_i32, %arg0 : i32, i32
  }
}

</mosaic_0001>

<llo_original>
// kernel: tpu_custom_call.1
$region0: #{tpu_custom_call.1}
  #allocation0 [shape = 'u32[]', space=smem, size = 0x4, offset = 0x4, fixed_abs, tag = 'smem constant byte address 0x4 - core index']
  #allocation1 [shape = 'u32[72,128]{1,0:T(1,128)}', space=vmem, size = 0x9000, scoped, tag = 'internal scratch']
  %s0 = inlined_call_operand.hbm [shape: f32[8,256], index: 0, kind: input, shape index: {}]
  %s1 = inlined_call_operand.hbm [shape: f32[256,128], index: 1, kind: input, shape index: {}]
  %s2 = inlined_call_operand.hbm [shape: f32[8,128], index: 2, kind: output, shape index: {}]
  %s3 = sld [smem:[#allocation0]]
  $region30: #{tpu_custom_call.1} parent=0
    _
  %s5 = ssub.s32 1, %s3
  %s6 = scalar_select 0, %s5, %s3
  $region1: #{tpu_custom_call.1} parent=0
    #allocation2 [shape = 'u8[8192]{0}', space=vmem, size = 0x2000, scoped, tag = 'input window, operand 0, single buffered']
    #allocation3 [shape = 's32[1]{0}', space=sflag, size = 0x4, scoped, tag = 'scoped memory for tpu_custom_call.1']
    #allocation4 [shape = 's32[1]{0}', space=sflag, size = 0x4, scoped, tag = 'scoped memory for tpu_custom_call.1']
    #allocation5 [shape = 'u8[131072]{0}', space=vmem, size = 0x20000, scoped, tag = 'input window, operand 1, single buffered']
    #allocation6 [shape = 's32[1]{0}', space=sflag, size = 0x4, scoped, tag = 'scoped memory for tpu_custom_call.1']
    #allocation7 [shape = 'u8[4096]{0}', space=vmem, size = 0x1000, scoped, tag = 'output window, operand 0, single buffered']
    %7 = vsyncpa [#allocation3], 0
    %8 = vsyncpa [#allocation6], 0
    %9 = vsyncpa [#allocation4], 0
    // Predicated region
    $region2: #{tpu_custom_call.1} parent=1 // pred_check
      _
    $region3: #{tpu_custom_call.1} parent=1 // pred_check_branch
      %11 = sbr.rel (0) target = $region5
    $region4: #{tpu_custom_call.1} parent=1 // pred_region
      %13 = vsyncadd [#allocation3], 0
      %s15 = sshll.u32 %s0, 4
      %s16 = int_to_ptr.hbm [resolvable:$true] %s15
      %s17 = sshll.u32 [#allocation2], 4
      %s18 = int_to_ptr.vmem [resolvable:$true] %s17
      %20 = dma.hbm_to_vmem [thread:$0]  %s16, 256, %s18, [#allocation3]
    $region5: #{tpu_custom_call.1} parent=1 // pred_fallthru
      _
    // Predicated region
    $region6: #{tpu_custom_call.1} parent=1 // pred_check
      _
    $region7: #{tpu_custom_call.1} parent=1 // pred_check_branch
      %22 = sbr.rel (0) target = $region9
    $region8: #{tpu_custom_call.1} parent=1 // pred_region
      %24 = vsyncadd [#allocation6], 0
      %s25 = sshll.u32 %s1, 4
      %s26 = int_to_ptr.hbm [resolvable:$true] %s25
      %s27 = sshll.u32 [#allocation5], 4
      %s28 = int_to_ptr.vmem [resolvable:$true] %s27
      %33 = dma.hbm_to_vmem [thread:$0]  %s26, 4096, %s28, [#allocation6], 128, 128, 8
    $region9: #{tpu_custom_call.1} parent=1 // pred_fallthru
      _
    // Predicated region
    $region10: #{tpu_custom_call.1} parent=1 // pred_check
      _
    $region11: #{tpu_custom_call.1} parent=1 // pred_check_branch
      %35 = sbr.rel (0) target = $region13
    $region12: #{tpu_custom_call.1} parent=1 // pred_region
      %37 = dma.done [#allocation3], 256
    $region13: #{tpu_custom_call.1} parent=1 // pred_fallthru
      _
    // Predicated region
    $region14: #{tpu_custom_call.1} parent=1 // pred_check
      _
    $region15: #{tpu_custom_call.1} parent=1 // pred_check_branch
      %39 = sbr.rel (0) target = $region17
    $region16: #{tpu_custom_call.1} parent=1 // pred_region
      %41 = dma.done [#allocation6], 4096
    $region17: #{tpu_custom_call.1} parent=1 // pred_fallthru
      _
    %p42 = scmp.eq.s32.totalorder 0, 0
    // Predicated region
    $region18: #{tpu_custom_call.1} parent=1 // pred_check
      %p43 = pneg %p42
    $region19: #{tpu_custom_call.1} parent=1 // pred_check_branch
      %45 = sbr.rel (%p43) target = $region21
    $region20: #{tpu_custom_call.1} parent=1 // pred_region
      %46 = vst [vmem:[#allocation7] sm:$0xff] 0.0
    $region21: #{tpu_custom_call.1} parent=1 // pred_fallthru
      _
    %v47 = vld [vmem:[#allocation7] sm:$0xff]
    %v48 = vld [vmem:[#allocation2] sm:$0xff]
    %v49 = vld [vmem:[#allocation2 + $0x8] sm:$0xff]
    %v50 = vld [vmem:[#allocation5] sm:$0xff]
    %v51 = vld [vmem:[#allocation5 + $0x8] sm:$0xff]
    %v52 = vld [vmem:[#allocation5 + $0x10] sm:$0xff]
    %v53 = vld [vmem:[#allocation5 + $0x18] sm:$0xff]
    %v54 = vld [vmem:[#allocation5 + $0x20] sm:$0xff]
    %v55 = vld [vmem:[#allocation5 + $0x28] sm:$0xff]
    %v56 = vld [vmem:[#allocation5 + $0x30] sm:$0xff]
    %v57 = vld [vmem:[#allocation5 + $0x38] sm:$0xff]
    %v58 = vld [vmem:[#allocation5 + $0x40] sm:$0xff]
    %v59 = vld [vmem:[#allocation5 + $0x48] sm:$0xff]
    %v60 = vld [vmem:[#allocation5 + $0x50] sm:$0xff]
    %v61 = vld [vmem:[#allocation5 + $0x58] sm:$0xff]
    %v62 = vld [vmem:[#allocation5 + $0x60] sm:$0xff]
    %v63 = vld [vmem:[#allocation5 + $0x68] sm:$0xff]
    %v64 = vld [vmem:[#allocation5 + $0x70] sm:$0xff]
    %v65 = vld [vmem:[#allocation5 + $0x78] sm:$0xff]
    %v66 = vld [vmem:[#allocation5 + $0x80] sm:$0xff]
    %v67 = vld [vmem:[#allocation5 + $0x88] sm:$0xff]
    %v68 = vld [vmem:[#allocation5 + $0x90] sm:$0xff]
    %v69 = vld [vmem:[#allocation5 + $0x98] sm:$0xff]
    %v70 = vld [vmem:[#allocation5 + $0xa0] sm:$0xff]
    %v71 = vld [vmem:[#allocation5 + $0xa8] sm:$0xff]
    %v72 = vld [vmem:[#allocation5 + $0xb0] sm:$0xff]
    %v73 = vld [vmem:[#allocation5 + $0xb8] sm:$0xff]
    %v74 = vld [vmem:[#allocation5 + $0xc0] sm:$0xff]
    %v75 = vld [vmem:[#allocation5 + $0xc8] sm:$0xff]
    %v76 = vld [vmem:[#allocation5 + $0xd0] sm:$0xff]
    %v77 = vld [vmem:[#allocation5 + $0xd8] sm:$0xff]
    %v78 = vld [vmem:[#allocation5 + $0xe0] sm:$0xff]
    %v79 = vld [vmem:[#allocation5 + $0xe8] sm:$0xff]
    %v80 = vld [vmem:[#allocation5 + $0xf0] sm:$0xff]
    %v81 = vld [vmem:[#allocation5 + $0xf8] sm:$0xff]
    %v82 = vand.u32 %v65, 4294901760
    %83 = vmatpush.msra.mxu0 %v82
    %v84 = vand.u32 %v64, 4294901760
    %85 = vmatpush.msra.mxu0 %v84
    %v86 = vand.u32 %v63, 4294901760
    %87 = vmatpush.msra.mxu0 %v86
    %v88 = vand.u32 %v62, 4294901760
    %89 = vmatpush.msra.mxu0 %v88
    %v90 = vand.u32 %v61, 4294901760
    %91 = vmatpush.msra.mxu0 %v90
    %v92 = vand.u32 %v60, 4294901760
    %93 = vmatpush.msra.mxu0 %v92
    %v94 = vand.u32 %v59, 4294901760
    %95 = vmatpush.msra.mxu0 %v94
    %v96 = vand.u32 %v58, 4294901760
    %97 = vmatpush.msra.mxu0 %v96
    %v98 = vand.u32 %v57, 4294901760
    %99 = vmatpush.msra.mxu0 %v98
    %v100 = vand.u32 %v56, 4294901760
    %101 = vmatpush.msra.mxu0 %v100
    %v102 = vand.u32 %v55, 4294901760
    %103 = vmatpush.msra.mxu0 %v102
    %v104 = vand.u32 %v54, 4294901760
    %105 = vmatpush.msra.mxu0 %v104
    %v106 = vand.u32 %v53, 4294901760
    %107 = vmatpush.msra.mxu0 %v106
    %v108 = vand.u32 %v52, 4294901760
    %109 = vmatpush.msra.mxu0 %v108
    %v110 = vand.u32 %v51, 4294901760
    %111 = vmatpush.msra.mxu0 %v110
    %v112 = vand.u32 %v50, 4294901760
    %113 = vmatpush.msra.mxu0 %v112
    %v114 = vand.u32 %v48, 4294901760
    %v115 = vsub.f32 %v48, %v114
    %v116 = vand.u32 %v115, 4294901760
    %v117 = vsub.f32 %v115, %v116
    %v118 = vand.u32 %v117, 4294901760
    %119 = vmatmul.f32.gmra.mxu0 %v118
    %v120 = vpop.f32.mrf.mxu0
    %v121 = vadd.f32 0.0, %v120
    %122 = vdwg.mxu0
    %v123 = vand.u32 %v65, 4294901760
    %v124 = vsub.f32 %v65, %v123
    %v125 = vand.u32 %v124, 4294901760
    %v126 = vsub.f32 %v124, %v125
    %v127 = vand.u32 %v126, 4294901760
    %128 = vmatpush.msra.mxu0 %v127
    %v129 = vand.u32 %v64, 4294901760
    %v130 = vsub.f32 %v64, %v129
    %v131 = vand.u32 %v130, 4294901760
    %v132 = vsub.f32 %v130, %v131
    %v133 = vand.u32 %v132, 4294901760
    %134 = vmatpush.msra.mxu0 %v133
    %v135 = vand.u32 %v63, 4294901760
    %v136 = vsub.f32 %v63, %v135
    %v137 = vand.u32 %v136, 4294901760
    %v138 = vsub.f32 %v136, %v137
    %v139 = vand.u32 %v138, 4294901760
    %140 = vmatpush.msra.mxu0 %v139
    %v141 = vand.u32 %v62, 4294901760
    %v142 = vsub.f32 %v62, %v141
    %v143 = vand.u32 %v142, 4294901760
    %v144 = vsub.f32 %v142, %v143
    %v145 = vand.u32 %v144, 4294901760
    %146 = vmatpush.msra.mxu0 %v145
    %v147 = vand.u32 %v61, 4294901760
    %v148 = vsub.f32 %v61, %v147
    %v149 = vand.u32 %v148, 4294901760
    %v150 = vsub.f32 %v148, %v149
    %v151 = vand.u32 %v150, 4294901760
    %152 = vmatpush.msra.mxu0 %v151
    %v153 = vand.u32 %v60, 4294901760
    %v154 = vsub.f32 %v60, %v153
    %v155 = vand.u32 %v154, 4294901760
    %v156 = vsub.f32 %v154, %v155
    %v157 = vand.u32 %v156, 4294901760
    %158 = vmatpush.msra.mxu0 %v157
    %v159 = vand.u32 %v59, 4294901760
    %v160 = vsub.f32 %v59, %v159
    %v161 = vand.u32 %v160, 4294901760
    %v162 = vsub.f32 %v160, %v161
    %v163 = vand.u32 %v162, 4294901760
    %164 = vmatpush.msra.mxu0 %v163
    %v165 = vand.u32 %v58, 4294901760
    %v166 = vsub.f32 %v58, %v165
    %v167 = vand.u32 %v166, 4294901760
    %v168 = vsub.f32 %v166, %v167
    %v169 = vand.u32 %v168, 4294901760
    %170 = vmatpush.msra.mxu0 %v169
    %v171 = vand.u32 %v57, 4294901760
    %v172 = vsub.f32 %v57, %v171
    %v173 = vand.u32 %v172, 4294901760
    %v174 = vsub.f32 %v172, %v173
    %v175 = vand.u32 %v174, 4294901760
    %176 = vmatpush.msra.mxu0 %v175
    %v177 = vand.u32 %v56, 4294901760
    %v178 = vsub.f32 %v56, %v177
    %v179 = vand.u32 %v178, 4294901760
    %v180 = vsub.f32 %v178, %v179
    %v181 = vand.u32 %v180, 4294901760
    %182 = vmatpush.msra.mxu0 %v181
    %v183 = vand.u32 %v55, 4294901760
    %v184 = vsub.f32 %v55, %v183
    %v185 = vand.u32 %v184, 4294901760
    %v186 = vsub.f32 %v184, %v185
    %v187 = vand.u32 %v186, 4294901760
    %188 = vmatpush.msra.mxu0 %v187
    %v189 = vand.u32 %v54, 4294901760
    %v190 = vsub.f32 %v54, %v189
    %v191 = vand.u32 %v190, 4294901760
    %v192 = vsub.f32 %v190, %v191
    %v193 = vand.u32 %v192, 4294901760
    %194 = vmatpush.msra.mxu0 %v193
    %v195 = vand.u32 %v53, 4294901760
    %v196 = vsub.f32 %v53, %v195
    %v197 = vand.u32 %v196, 4294901760
    %v198 = vsub.f32 %v196, %v197
    %v199 = vand.u32 %v198, 4294901760
    %200 = vmatpush.msra.mxu0 %v199
    %v201 = vand.u32 %v52, 4294901760
    %v202 = vsub.f32 %v52, %v201
    %v203 = vand.u32 %v202, 4294901760
    %v204 = vsub.f32 %v202, %v203
    %v205 = vand.u32 %v204, 4294901760
    %206 = vmatpush.msra.mxu0 %v205
    %v207 = vand.u32 %v51, 4294901760
    %v208 = vsub.f32 %v51, %v207
    %v209 = vand.u32 %v208, 4294901760
    %v210 = vsub.f32 %v208, %v209
    %v211 = vand.u32 %v210, 4294901760
    %212 = vmatpush.msra.mxu0 %v211
    %v213 = vand.u32 %v50, 4294901760
    %v214 = vsub.f32 %v50, %v213
    %v215 = vand.u32 %v214, 4294901760
    %v216 = vsub.f32 %v214, %v215
    %v217 = vand.u32 %v216, 4294901760
    %218 = vmatpush.msra.mxu0 %v217
    %v219 = vand.u32 %v48, 4294901760
    %220 = vmatmul.f32.gmra.mxu0 %v219
    %v221 = vpop.f32.mrf.mxu0
    %v222 = vadd.f32 %v121, %v221
    %223 = vdwg.mxu0
    %v224 = vand.u32 %v65, 4294901760
    %v225 = vsub.f32 %v65, %v224
    %226 = vmatpush.msra.mxu0 %v225
    %v227 = vand.u32 %v64, 4294901760
    %v228 = vsub.f32 %v64, %v227
    %229 = vmatpush.msra.mxu0 %v228
    %v230 = vand.u32 %v63, 4294901760
    %v231 = vsub.f32 %v63, %v230
    %232 = vmatpush.msra.mxu0 %v231
    %v233 = vand.u32 %v62, 4294901760
    %v234 = vsub.f32 %v62, %v233
    %235 = vmatpush.msra.mxu0 %v234
    %v236 = vand.u32 %v61, 4294901760
    %v237 = vsub.f32 %v61, %v236
    %238 = vmatpush.msra.mxu0 %v237
    %v239 = vand.u32 %v60, 4294901760
    %v240 = vsub.f32 %v60, %v239
    %241 = vmatpush.msra.mxu0 %v240
    %v242 = vand.u32 %v59, 4294901760
    %v243 = vsub.f32 %v59, %v242
    %244 = vmatpush.msra.mxu0 %v243
    %v245 = vand.u32 %v58, 4294901760
    %v246 = vsub.f32 %v58, %v245
    %247 = vmatpush.msra.mxu0 %v246
    %v248 = vand.u32 %v57, 4294901760
    %v249 = vsub.f32 %v57, %v248
    %250 = vmatpush.msra.mxu0 %v249
    %v251 = vand.u32 %v56, 4294901760
    %v252 = vsub.f32 %v56, %v251
    %253 = vmatpush.msra.mxu0 %v252
    %v254 = vand.u32 %v55, 4294901760
    %v255 = vsub.f32 %v55, %v254
    %256 = vmatpush.msra.mxu0 %v255
    %v257 = vand.u32 %v54, 4294901760
    %v258 = vsub.f32 %v54, %v257
    %259 = vmatpush.msra.mxu0 %v258
    %v260 = vand.u32 %v53, 4294901760
    %v261 = vsub.f32 %v53, %v260
    %262 = vmatpush.msra.mxu0 %v261
    %v263 = vand.u32 %v52, 4294901760
    %v264 = vsub.f32 %v52, %v263
    %265 = vmatpush.msra.mxu0 %v264
    %v266 = vand.u32 %v51, 4294901760
    %v267 = vsub.f32 %v51, %v266
    %268 = vmatpush.msra.mxu0 %v267
    %v269 = vand.u32 %v50, 4294901760
    %v270 = vsub.f32 %v50, %v269
    %271 = vmatpush.msra.mxu0 %v270
    %v272 = vand.u32 %v48, 4294901760
    %v273 = vsub.f32 %v48, %v272
    %274 = vmatmul.f32.gmra.mxu0 %v273
    %v275 = vpop.f32.mrf.mxu0
    %v276 = vadd.f32 %v222, %v275
    %277 = vdwg.mxu0
    %v278 = vand.u32 %v65, 4294901760
    %279 = vmatpush.msra.mxu0 %v278
    %v280 = vand.u32 %v64, 4294901760
    %281 = vmatpush.msra.mxu0 %v280
    %v282 = vand.u32 %v63, 4294901760
    %283 = vmatpush.msra.mxu0 %v282
    %v284 = vand.u32 %v62, 4294901760
    %285 = vmatpush.msra.mxu0 %v284
    %v286 = vand.u32 %v61, 4294901760
    %287 = vmatpush.msra.mxu0 %v286
    %v288 = vand.u32 %v60, 4294901760
    %289 = vmatpush.msra.mxu0 %v288
    %v290 = vand.u32 %v59, 4294901760
    %291 = vmatpush.msra.mxu0 %v290
    %v292 = vand.u32 %v58, 4294901760
    %293 = vmatpush.msra.mxu0 %v292
    %v294 = vand.u32 %v57, 4294901760
    %295 = vmatpush.msra.mxu0 %v294
    %v296 = vand.u32 %v56, 4294901760
    %297 = vmatpush.msra.mxu0 %v296
    %v298 = vand.u32 %v55, 4294901760
    %299 = vmatpush.msra.mxu0 %v298
    %v300 = vand.u32 %v54, 4294901760
    %301 = vmatpush.msra.mxu0 %v300
    %v302 = vand.u32 %v53, 4294901760
    %303 = vmatpush.msra.mxu0 %v302
    %v304 = vand.u32 %v52, 4294901760
    %305 = vmatpush.msra.mxu0 %v304
    %v306 = vand.u32 %v51, 4294901760
    %307 = vmatpush.msra.mxu0 %v306
    %v308 = vand.u32 %v50, 4294901760
    %309 = vmatpush.msra.mxu0 %v308
    %v310 = vand.u32 %v48, 4294901760
    %v311 = vsub.f32 %v48, %v310
    %v312 = vand.u32 %v311, 4294901760
    %313 = vmatmul.f32.gmra.mxu0 %v312
    %v314 = vpop.f32.mrf.mxu0
    %v315 = vadd.f32 %v276, %v314
    %316 = vdwg.mxu0
    %v317 = vand.u32 %v65, 4294901760
    %v318 = vsub.f32 %v65, %v317
    %v319 = vand.u32 %v318, 4294901760
    %320 = vmatpush.msra.mxu0 %v319
    %v321 = vand.u32 %v64, 4294901760
    %v322 = vsub.f32 %v64, %v321
    %v323 = vand.u32 %v322, 4294901760
    %324 = vmatpush.msra.mxu0 %v323
    %v325 = vand.u32 %v63, 4294901760
    %v326 = vsub.f32 %v63, %v325
    %v327 = vand.u32 %v326, 4294901760
    %328 = vmatpush.msra.mxu0 %v327
    %v329 = vand.u32 %v62, 4294901760
    %v330 = vsub.f32 %v62, %v329
    %v331 = vand.u32 %v330, 4294901760
    %332 = vmatpush.msra.mxu0 %v331
    %v333 = vand.u32 %v61, 4294901760
    %v334 = vsub.f32 %v61, %v333
    %v335 = vand.u32 %v334, 4294901760
    %336 = vmatpush.msra.mxu0 %v335
    %v337 = vand.u32 %v60, 4294901760
    %v338 = vsub.f32 %v60, %v337
    %v339 = vand.u32 %v338, 4294901760
    %340 = vmatpush.msra.mxu0 %v339
    %v341 = vand.u32 %v59, 4294901760
    %v342 = vsub.f32 %v59, %v341
    %v343 = vand.u32 %v342, 4294901760
    %344 = vmatpush.msra.mxu0 %v343
    %v345 = vand.u32 %v58, 4294901760
    %v346 = vsub.f32 %v58, %v345
    %v347 = vand.u32 %v346, 4294901760
    %348 = vmatpush.msra.mxu0 %v347
    %v349 = vand.u32 %v57, 4294901760
    %v350 = vsub.f32 %v57, %v349
    %v351 = vand.u32 %v350, 4294901760
    %352 = vmatpush.msra.mxu0 %v351
    %v353 = vand.u32 %v56, 4294901760
    %v354 = vsub.f32 %v56, %v353
    %v355 = vand.u32 %v354, 4294901760
    %356 = vmatpush.msra.mxu0 %v355
    %v357 = vand.u32 %v55, 4294901760
    %v358 = vsub.f32 %v55, %v357
    %v359 = vand.u32 %v358, 4294901760
    %360 = vmatpush.msra.mxu0 %v359
    %v361 = vand.u32 %v54, 4294901760
    %v362 = vsub.f32 %v54, %v361
    %v363 = vand.u32 %v362, 4294901760
    %364 = vmatpush.msra.mxu0 %v363
    %v365 = vand.u32 %v53, 4294901760
    %v366 = vsub.f32 %v53, %v365
    %v367 = vand.u32 %v366, 4294901760
    %368 = vmatpush.msra.mxu0 %v367
    %v369 = vand.u32 %v52, 4294901760
    %v370 = vsub.f32 %v52, %v369
    %v371 = vand.u32 %v370, 4294901760
    %372 = vmatpush.msra.mxu0 %v371
    %v373 = vand.u32 %v51, 4294901760
    %v374 = vsub.f32 %v51, %v373
    %v375 = vand.u32 %v374, 4294901760
    %376 = vmatpush.msra.mxu0 %v375
    %v377 = vand.u32 %v50, 4294901760
    %v378 = vsub.f32 %v50, %v377
    %v379 = vand.u32 %v378, 4294901760
    %380 = vmatpush.msra.mxu0 %v379
    %v381 = vand.u32 %v48, 4294901760
    %382 = vmatmul.f32.gmra.mxu0 %v381
    %v383 = vpop.f32.mrf.mxu0
    %v384 = vadd.f32 %v315, %v383
    %385 = vdwg.mxu0
    %v386 = vand.u32 %v65, 4294901760
    %387 = vmatpush.msra.mxu0 %v386
    %v388 = vand.u32 %v64, 4294901760
    %389 = vmatpush.msra.mxu0 %v388
    %v390 = vand.u32 %v63, 4294901760
    %391 = vmatpush.msra.mxu0 %v390
    %v392 = vand.u32 %v62, 4294901760
    %393 = vmatpush.msra.mxu0 %v392
    %v394 = vand.u32 %v61, 4294901760
    %395 = vmatpush.msra.mxu0 %v394
    %v396 = vand.u32 %v60, 4294901760
    %397 = vmatpush.msra.mxu0 %v396
    %v398 = vand.u32 %v59, 4294901760
    %399 = vmatpush.msra.mxu0 %v398
    %v400 = vand.u32 %v58, 4294901760
    %401 = vmatpush.msra.mxu0 %v400
    %v402 = vand.u32 %v57, 4294901760
    %403 = vmatpush.msra.mxu0 %v402
    %v404 = vand.u32 %v56, 4294901760
    %405 = vmatpush.msra.mxu0 %v404
    %v406 = vand.u32 %v55, 4294901760
    %407 = vmatpush.msra.mxu0 %v406
    %v408 = vand.u32 %v54, 4294901760
    %409 = vmatpush.msra.mxu0 %v408
    %v410 = vand.u32 %v53, 4294901760
    %411 = vmatpush.msra.mxu0 %v410
    %v412 = vand.u32 %v52, 4294901760
    %413 = vmatpush.msra.mxu0 %v412
    %v414 = vand.u32 %v51, 4294901760
    %415 = vmatpush.msra.mxu0 %v414
    %v416 = vand.u32 %v50, 4294901760
    %417 = vmatpush.msra.mxu0 %v416
    %v418 = vand.u32 %v48, 4294901760
    %419 = vmatmul.f32.gmra.mxu0 %v418
    %v420 = vpop.f32.mrf.mxu0
    %v421 = vadd.f32 %v384, %v420
    %422 = vdwg.mxu0
    %v423 = vand.u32 %v81, 4294901760
    %424 = vmatpush.msra.mxu0 %v423
    %v425 = vand.u32 %v80, 4294901760
    %426 = vmatpush.msra.mxu0 %v425
    %v427 = vand.u32 %v79, 4294901760
    %428 = vmatpush.msra.mxu0 %v427
    %v429 = vand.u32 %v78, 4294901760
    %430 = vmatpush.msra.mxu0 %v429
    %v431 = vand.u32 %v77, 4294901760
    %432 = vmatpush.msra.mxu0 %v431
    %v433 = vand.u32 %v76, 4294901760
    %434 = vmatpush.msra.mxu0 %v433
    %v435 = vand.u32 %v75, 4294901760
    %436 = vmatpush.msra.mxu0 %v435
    %v437 = vand.u32 %v74, 4294901760
    %438 = vmatpush.msra.mxu0 %v437
    %v439 = vand.u32 %v73, 4294901760
    %440 = vmatpush.msra.mxu0 %v439
    %v441 = vand.u32 %v72, 4294901760
    %442 = vmatpush.msra.mxu0 %v441
    %v443 = vand.u32 %v71, 4294901760
    %444 = vmatpush.msra.mxu0 %v443
    %v445 = vand.u32 %v70, 4294901760
    %446 = vmatpush.msra.mxu0 %v445
    %v447 = vand.u32 %v69, 4294901760
    %448 = vmatpush.msra.mxu0 %v447
    %v449 = vand.u32 %v68, 4294901760
    %450 = vmatpush.msra.mxu0 %v449
    %v451 = vand.u32 %v67, 4294901760
    %452 = vmatpush.msra.mxu0 %v451
    %v453 = vand.u32 %v66, 4294901760
    %454 = vmatpush.msra.mxu0 %v453
    %v455 = vand.u32 %v49, 4294901760
    %v456 = vsub.f32 %v49, %v455
    %v457 = vand.u32 %v456, 4294901760
    %v458 = vsub.f32 %v456, %v457
    %v459 = vand.u32 %v458, 4294901760
    %460 = vmatmul.f32.gmra.mxu0 %v459
    %v461 = vpop.f32.mrf.mxu0
    %v462 = vadd.f32 %v421, %v461
    %463 = vdwg.mxu0
    %v464 = vand.u32 %v81, 4294901760
    %v465 = vsub.f32 %v81, %v464
    %v466 = vand.u32 %v465, 4294901760
    %v467 = vsub.f32 %v465, %v466
    %v468 = vand.u32 %v467, 4294901760
    %469 = vmatpush.msra.mxu0 %v468
    %v470 = vand.u32 %v80, 4294901760
    %v471 = vsub.f32 %v80, %v470
    %v472 = vand.u32 %v471, 4294901760
    %v473 = vsub.f32 %v471, %v472
    %v474 = vand.u32 %v473, 4294901760
    %475 = vmatpush.msra.mxu0 %v474
    %v476 = vand.u32 %v79, 4294901760
    %v477 = vsub.f32 %v79, %v476
    %v478 = vand.u32 %v477, 4294901760
    %v479 = vsub.f32 %v477, %v478
    %v480 = vand.u32 %v479, 4294901760
    %481 = vmatpush.msra.mxu0 %v480
    %v482 = vand.u32 %v78, 4294901760
    %v483 = vsub.f32 %v78, %v482
    %v484 = vand.u32 %v483, 4294901760
    %v485 = vsub.f32 %v483, %v484
    %v486 = vand.u32 %v485, 4294901760
    %487 = vmatpush.msra.mxu0 %v486
    %v488 = vand.u32 %v77, 4294901760
    %v489 = vsub.f32 %v77, %v488
    %v490 = vand.u32 %v489, 4294901760
    %v491 = vsub.f32 %v489, %v490
    %v492 = vand.u32 %v491, 4294901760
    %493 = vmatpush.msra.mxu0 %v492
    %v494 = vand.u32 %v76, 4294901760
    %v495 = vsub.f32 %v76, %v494
    %v496 = vand.u32 %v495, 4294901760
    %v497 = vsub.f32 %v495, %v496
    %v498 = vand.u32 %v497, 4294901760
    %499 = vmatpush.msra.mxu0 %v498
    %v500 = vand.u32 %v75, 4294901760
    %v501 = vsub.f32 %v75, %v500
    %v502 = vand.u32 %v501, 4294901760
    %v503 = vsub.f32 %v501, %v502
    %v504 = vand.u32 %v503, 4294901760
    %505 = vmatpush.msra.mxu0 %v504
    %v506 = vand.u32 %v74, 4294901760
    %v507 = vsub.f32 %v74, %v506
    %v508 = vand.u32 %v507, 4294901760
    %v509 = vsub.f32 %v507, %v508
    %v510 = vand.u32 %v509, 4294901760
    %511 = vmatpush.msra.mxu0 %v510
    %v512 = vand.u32 %v73, 4294901760
    %v513 = vsub.f32 %v73, %v512
    %v514 = vand.u32 %v513, 4294901760
    %v515 = vsub.f32 %v513, %v514
    %v516 = vand.u32 %v515, 4294901760
    %517 = vmatpush.msra.mxu0 %v516
    %v518 = vand.u32 %v72, 4294901760
    %v519 = vsub.f32 %v72, %v518
    %v520 = vand.u32 %v519, 4294901760
    %v521 = vsub.f32 %v519, %v520
    %v522 = vand.u32 %v521, 4294901760
    %523 = vmatpush.msra.mxu0 %v522
    %v524 = vand.u32 %v71, 4294901760
    %v525 = vsub.f32 %v71, %v524
    %v526 = vand.u32 %v525, 4294901760
    %v527 = vsub.f32 %v525, %v526
    %v528 = vand.u32 %v527, 4294901760
    %529 = vmatpush.msra.mxu0 %v528
    %v530 = vand.u32 %v70, 4294901760
    %v531 = vsub.f32 %v70, %v530
    %v532 = vand.u32 %v531, 4294901760
    %v533 = vsub.f32 %v531, %v532
    %v534 = vand.u32 %v533, 4294901760
    %535 = vmatpush.msra.mxu0 %v534
    %v536 = vand.u32 %v69, 4294901760
    %v537 = vsub.f32 %v69, %v536
    %v538 = vand.u32 %v537, 4294901760
    %v539 = vsub.f32 %v537, %v538
    %v540 = vand.u32 %v539, 4294901760
    %541 = vmatpush.msra.mxu0 %v540
    %v542 = vand.u32 %v68, 4294901760
    %v543 = vsub.f32 %v68, %v542
    %v544 = vand.u32 %v543, 4294901760
    %v545 = vsub.f32 %v543, %v544
    %v546 = vand.u32 %v545, 4294901760
    %547 = vmatpush.msra.mxu0 %v546
    %v548 = vand.u32 %v67, 4294901760
    %v549 = vsub.f32 %v67, %v548
    %v550 = vand.u32 %v549, 4294901760
    %v551 = vsub.f32 %v549, %v550
    %v552 = vand.u32 %v551, 4294901760
    %553 = vmatpush.msra.mxu0 %v552
    %v554 = vand.u32 %v66, 4294901760
    %v555 = vsub.f32 %v66, %v554
    %v556 = vand.u32 %v555, 4294901760
    %v557 = vsub.f32 %v555, %v556
    %v558 = vand.u32 %v557, 4294901760
    %559 = vmatpush.msra.mxu0 %v558
    %v560 = vand.u32 %v49, 4294901760
    %561 = vmatmul.f32.gmra.mxu0 %v560
    %v562 = vpop.f32.mrf.mxu0
    %v563 = vadd.f32 %v462, %v562
    %564 = vdwg.mxu0
    %v565 = vand.u32 %v81, 4294901760
    %v566 = vsub.f32 %v81, %v565
    %567 = vmatpush.msra.mxu0 %v566
    %v568 = vand.u32 %v80, 4294901760
    %v569 = vsub.f32 %v80, %v568
    %570 = vmatpush.msra.mxu0 %v569
    %v571 = vand.u32 %v79, 4294901760
    %v572 = vsub.f32 %v79, %v571
    %573 = vmatpush.msra.mxu0 %v572
    %v574 = vand.u32 %v78, 4294901760
    %v575 = vsub.f32 %v78, %v574
    %576 = vmatpush.msra.mxu0 %v575
    %v577 = vand.u32 %v77, 4294901760
    %v578 = vsub.f32 %v77, %v577
    %579 = vmatpush.msra.mxu0 %v578
    %v580 = vand.u32 %v76, 4294901760
    %v581 = vsub.f32 %v76, %v580
    %582 = vmatpush.msra.mxu0 %v581
    %v583 = vand.u32 %v75, 4294901760
    %v584 = vsub.f32 %v75, %v583
    %585 = vmatpush.msra.mxu0 %v584
    %v586 = vand.u32 %v74, 4294901760
    %v587 = vsub.f32 %v74, %v586
    %588 = vmatpush.msra.mxu0 %v587
    %v589 = vand.u32 %v73, 4294901760
    %v590 = vsub.f32 %v73, %v589
    %591 = vmatpush.msra.mxu0 %v590
    %v592 = vand.u32 %v72, 4294901760
    %v593 = vsub.f32 %v72, %v592
    %594 = vmatpush.msra.mxu0 %v593
    %v595 = vand.u32 %v71, 4294901760
    %v596 = vsub.f32 %v71, %v595
    %597 = vmatpush.msra.mxu0 %v596
    %v598 = vand.u32 %v70, 4294901760
    %v599 = vsub.f32 %v70, %v598
    %600 = vmatpush.msra.mxu0 %v599
    %v601 = vand.u32 %v69, 4294901760
    %v602 = vsub.f32 %v69, %v601
    %603 = vmatpush.msra.mxu0 %v602
    %v604 = vand.u32 %v68, 4294901760
    %v605 = vsub.f32 %v68, %v604
    %606 = vmatpush.msra.mxu0 %v605
    %v607 = vand.u32 %v67, 4294901760
    %v608 = vsub.f32 %v67, %v607
    %609 = vmatpush.msra.mxu0 %v608
    %v610 = vand.u32 %v66, 4294901760
    %v611 = vsub.f32 %v66, %v610
    %612 = vmatpush.msra.mxu0 %v611
    %v613 = vand.u32 %v49, 4294901760
    %v614 = vsub.f32 %v49, %v613
    %615 = vmatmul.f32.gmra.mxu0 %v614
    %v616 = vpop.f32.mrf.mxu0
    %v617 = vadd.f32 %v563, %v616
    %618 = vdwg.mxu0
    %v619 = vand.u32 %v81, 4294901760
    %620 = vmatpush.msra.mxu0 %v619
    %v621 = vand.u32 %v80, 4294901760
    %622 = vmatpush.msra.mxu0 %v621
    %v623 = vand.u32 %v79, 4294901760
    %624 = vmatpush.msra.mxu0 %v623
    %v625 = vand.u32 %v78, 4294901760
    %626 = vmatpush.msra.mxu0 %v625
    %v627 = vand.u32 %v77, 4294901760
    %628 = vmatpush.msra.mxu0 %v627
    %v629 = vand.u32 %v76, 4294901760
    %630 = vmatpush.msra.mxu0 %v629
    %v631 = vand.u32 %v75, 4294901760
    %632 = vmatpush.msra.mxu0 %v631
    %v633 = vand.u32 %v74, 4294901760
    %634 = vmatpush.msra.mxu0 %v633
    %v635 = vand.u32 %v73, 4294901760
    %636 = vmatpush.msra.mxu0 %v635
    %v637 = vand.u32 %v72, 4294901760
    %638 = vmatpush.msra.mxu0 %v637
    %v639 = vand.u32 %v71, 4294901760
    %640 = vmatpush.msra.mxu0 %v639
    %v641 = vand.u32 %v70, 4294901760
    %642 = vmatpush.msra.mxu0 %v641
    %v643 = vand.u32 %v69, 4294901760
    %644 = vmatpush.msra.mxu0 %v643
    %v645 = vand.u32 %v68, 4294901760
    %646 = vmatpush.msra.mxu0 %v645
    %v647 = vand.u32 %v67, 4294901760
    %648 = vmatpush.msra.mxu0 %v647
    %v649 = vand.u32 %v66, 4294901760
    %650 = vmatpush.msra.mxu0 %v649
    %v651 = vand.u32 %v49, 4294901760
    %v652 = vsub.f32 %v49, %v651
    %v653 = vand.u32 %v652, 4294901760
    %654 = vmatmul.f32.gmra.mxu0 %v653
    %v655 = vpop.f32.mrf.mxu0
    %v656 = vadd.f32 %v617, %v655
    %657 = vdwg.mxu0
    %v658 = vand.u32 %v81, 4294901760
    %v659 = vsub.f32 %v81, %v658
    %v660 = vand.u32 %v659, 4294901760
    %661 = vmatpush.msra.mxu0 %v660
    %v662 = vand.u32 %v80, 4294901760
    %v663 = vsub.f32 %v80, %v662
    %v664 = vand.u32 %v663, 4294901760
    %665 = vmatpush.msra.mxu0 %v664
    %v666 = vand.u32 %v79, 4294901760
    %v667 = vsub.f32 %v79, %v666
    %v668 = vand.u32 %v667, 4294901760
    %669 = vmatpush.msra.mxu0 %v668
    %v670 = vand.u32 %v78, 4294901760
    %v671 = vsub.f32 %v78, %v670
    %v672 = vand.u32 %v671, 4294901760
    %673 = vmatpush.msra.mxu0 %v672
    %v674 = vand.u32 %v77, 4294901760
    %v675 = vsub.f32 %v77, %v674
    %v676 = vand.u32 %v675, 4294901760
    %677 = vmatpush.msra.mxu0 %v676
    %v678 = vand.u32 %v76, 4294901760
    %v679 = vsub.f32 %v76, %v678
    %v680 = vand.u32 %v679, 4294901760
    %681 = vmatpush.msra.mxu0 %v680
    %v682 = vand.u32 %v75, 4294901760
    %v683 = vsub.f32 %v75, %v682
    %v684 = vand.u32 %v683, 4294901760
    %685 = vmatpush.msra.mxu0 %v684
    %v686 = vand.u32 %v74, 4294901760
    %v687 = vsub.f32 %v74, %v686
    %v688 = vand.u32 %v687, 4294901760
    %689 = vmatpush.msra.mxu0 %v688
    %v690 = vand.u32 %v73, 4294901760
    %v691 = vsub.f32 %v73, %v690
    %v692 = vand.u32 %v691, 4294901760
    %693 = vmatpush.msra.mxu0 %v692
    %v694 = vand.u32 %v72, 4294901760
    %v695 = vsub.f32 %v72, %v694
    %v696 = vand.u32 %v695, 4294901760
    %697 = vmatpush.msra.mxu0 %v696
    %v698 = vand.u32 %v71, 4294901760
    %v699 = vsub.f32 %v71, %v698
    %v700 = vand.u32 %v699, 4294901760
    %701 = vmatpush.msra.mxu0 %v700
    %v702 = vand.u32 %v70, 4294901760
    %v703 = vsub.f32 %v70, %v702
    %v704 = vand.u32 %v703, 4294901760
    %705 = vmatpush.msra.mxu0 %v704
    %v706 = vand.u32 %v69, 4294901760
    %v707 = vsub.f32 %v69, %v706
    %v708 = vand.u32 %v707, 4294901760
    %709 = vmatpush.msra.mxu0 %v708
    %v710 = vand.u32 %v68, 4294901760
    %v711 = vsub.f32 %v68, %v710
    %v712 = vand.u32 %v711, 4294901760
    %713 = vmatpush.msra.mxu0 %v712
    %v714 = vand.u32 %v67, 4294901760
    %v715 = vsub.f32 %v67, %v714
    %v716 = vand.u32 %v715, 4294901760
    %717 = vmatpush.msra.mxu0 %v716
    %v718 = vand.u32 %v66, 4294901760
    %v719 = vsub.f32 %v66, %v718
    %v720 = vand.u32 %v719, 4294901760
    %721 = vmatpush.msra.mxu0 %v720
    %v722 = vand.u32 %v49, 4294901760
    %723 = vmatmul.f32.gmra.mxu0 %v722
    %v724 = vpop.f32.mrf.mxu0
    %v725 = vadd.f32 %v656, %v724
    %726 = vdwg.mxu0
    %v727 = vand.u32 %v81, 4294901760
    %728 = vmatpush.msra.mxu0 %v727
    %v729 = vand.u32 %v80, 4294901760
    %730 = vmatpush.msra.mxu0 %v729
    %v731 = vand.u32 %v79, 4294901760
    %732 = vmatpush.msra.mxu0 %v731
    %v733 = vand.u32 %v78, 4294901760
    %734 = vmatpush.msra.mxu0 %v733
    %v735 = vand.u32 %v77, 4294901760
    %736 = vmatpush.msra.mxu0 %v735
    %v737 = vand.u32 %v76, 4294901760
    %738 = vmatpush.msra.mxu0 %v737
    %v739 = vand.u32 %v75, 4294901760
    %740 = vmatpush.msra.mxu0 %v739
    %v741 = vand.u32 %v74, 4294901760
    %742 = vmatpush.msra.mxu0 %v741
    %v743 = vand.u32 %v73, 4294901760
    %744 = vmatpush.msra.mxu0 %v743
    %v745 = vand.u32 %v72, 4294901760
    %746 = vmatpush.msra.mxu0 %v745
    %v747 = vand.u32 %v71, 4294901760
    %748 = vmatpush.msra.mxu0 %v747
    %v749 = vand.u32 %v70, 4294901760
    %750 = vmatpush.msra.mxu0 %v749
    %v751 = vand.u32 %v69, 4294901760
    %752 = vmatpush.msra.mxu0 %v751
    %v753 = vand.u32 %v68, 4294901760
    %754 = vmatpush.msra.mxu0 %v753
    %v755 = vand.u32 %v67, 4294901760
    %756 = vmatpush.msra.mxu0 %v755
    %v757 = vand.u32 %v66, 4294901760
    %758 = vmatpush.msra.mxu0 %v757
    %v759 = vand.u32 %v49, 4294901760
    %760 = vmatmul.f32.gmra.mxu0 %v759
    %v761 = vpop.f32.mrf.mxu0
    %v762 = vadd.f32 %v725, %v761
    %763 = vdwg.mxu0
    %v764 = vadd.f32 %v47, %v762
    %765 = vst [vmem:[#allocation7] sm:$0xff] %v764
    // Predicated region
    $region22: #{tpu_custom_call.1} parent=1 // pred_check
      _
    $region23: #{tpu_custom_call.1} parent=1 // pred_check_branch
      %767 = sbr.rel (0) target = $region25
    $region24: #{tpu_custom_call.1} parent=1 // pred_region
      %769 = vsyncadd [#allocation4], 0
      %s771 = sshll.u32 [#allocation7], 4
      %s772 = int_to_ptr.vmem [resolvable:$true] %s771
      %s773 = sshll.u32 %s2, 4
      %s774 = int_to_ptr.hbm [resolvable:$true] %s773
      %776 = dma.vmem_to_hbm [thread:$0]  %s772, 128, %s774, [#allocation4]
    $region25: #{tpu_custom_call.1} parent=1 // pred_fallthru
      _
    // Predicated region
    $region26: #{tpu_custom_call.1} parent=1 // pred_check
      _
    $region27: #{tpu_custom_call.1} parent=1 // pred_check_branch
      %778 = sbr.rel (0) target = $region29
    $region28: #{tpu_custom_call.1} parent=1 // pred_region
      %780 = dma.done [#allocation4], 128
    $region29: #{tpu_custom_call.1} parent=1 // pred_fallthru
      _
    %781 = vsyncpa [#allocation3], 1
    %782 = vsyncpa [#allocation6], 1
    %783 = vsyncpa [#allocation4], 1

</llo_original>
